<compile_context>
chip_gen: v7x
topology: tpu7x:2x2x1
jax: 0.10.0
libtpu: 0.0.40
codegen_flags: <defaults>
</compile_context>

<pallas_src>
import jax
import jax.numpy as jnp
from jax.experimental import pallas as pl
from jax.experimental.pallas import tpu as pltpu


def decoder_kernel(x_ref,
                   w1_ref, b1_ref,
                   w2_ref, b2_ref,
                   w3_ref, b3_ref,
                   w4_ref, b4_ref,
                   o_ref):
    """Fused 4-layer decoder MLP on one batch tile:
       relu(relu(relu(x@W1+b1)@W2+b2)@W3+b3)@W4+b4."""
    h = jnp.dot(x_ref[...], w1_ref[...],
                preferred_element_type=jnp.float32) + b1_ref[...]
    h = jnp.maximum(h, 0.0)

    h = jnp.dot(h, w2_ref[...],
                preferred_element_type=jnp.float32) + b2_ref[...]
    h = jnp.maximum(h, 0.0)

    h = jnp.dot(h, w3_ref[...],
                preferred_element_type=jnp.float32) + b3_ref[...]
    h = jnp.maximum(h, 0.0)

    h = jnp.dot(h, w4_ref[...],
                preferred_element_type=jnp.float32) + b4_ref[...]

    o_ref[...] = h.astype(o_ref.dtype)


def decoder_forward(x, params, *, block_m=256):
    """Runs the fused decoder Pallas kernel.

    Args:
      x: (batch, latent_dim) float32
      params: dict with w1..w4 of shape (in, out) and b1..b4 of shape (1, out)
    Returns:
      (batch, inp_dim) float32
    """
    batch, latent_dim = x.shape
    enc_dim = params["w1"].shape[1]
    inp_dim = params["w4"].shape[1]

    # Batch tile: whole batch for small inputs (block == full dim is always
    # legal); otherwise a 256-row tile (multiple of 8) to fill the MXU M dim
    # and amortize the ~0.35us per-grid-step overhead.
    tm = batch if batch <= block_m else block_m
    pad = (-batch) % tm
    if pad:
        x = jnp.pad(x, ((0, pad), (0, 0)))
    padded_batch = batch + pad
    grid = (padded_batch // tm,)

    def resident(shape):
        # Weights / biases: same block index every grid step -> the pipeline
        # keeps them resident in VMEM (no re-DMA across batch tiles).
        return pl.BlockSpec(shape, lambda i: (0, 0))

    in_specs = [
        pl.BlockSpec((tm, latent_dim), lambda i: (i, 0)),   # x: batch-tiled
        resident(params["w1"].shape), resident(params["b1"].shape),
        resident(params["w2"].shape), resident(params["b2"].shape),
        resident(params["w3"].shape), resident(params["b3"].shape),
        resident(params["w4"].shape), resident(params["b4"].shape),
    ]
    out_spec = pl.BlockSpec((tm, inp_dim), lambda i: (i, 0))

    # Advisory cost estimate so XLA's scheduler sees real flop/byte counts.
    flops = 2 * padded_batch * (latent_dim * enc_dim
                                + enc_dim * enc_dim
                                + enc_dim * enc_dim
                                + enc_dim * inp_dim)
    param_bytes = sum(int(v.size) * v.dtype.itemsize for v in params.values())
    bytes_accessed = (padded_batch * latent_dim * 4
                      + padded_batch * inp_dim * 4
                      + param_bytes)
    cost = pl.CostEstimate(flops=flops, transcendentals=0,
                           bytes_accessed=bytes_accessed)

    out = pl.pallas_call(
        decoder_kernel,
        out_shape=jax.ShapeDtypeStruct((padded_batch, inp_dim), jnp.float32),
        grid=grid,
        in_specs=in_specs,
        out_specs=out_spec,
        compiler_params=pltpu.CompilerParams(
            dimension_semantics=("parallel",)),   # megacore on v7x
        cost_estimate=cost,
    )(x,
      params["w1"], params["b1"],
      params["w2"], params["b2"],
      params["w3"], params["b3"],
      params["w4"], params["b4"])

    if pad:
        out = out[:batch]
    return out


def init_decoder_params(key, latent_dim, enc_dim, inp_dim):
    """Deterministic parameter init (Kaiming-uniform-ish, like nn.Linear)."""
    dims = [(latent_dim, enc_dim), (enc_dim, enc_dim),
            (enc_dim, enc_dim), (enc_dim, inp_dim)]
    params = {}
    for i, (din, dout) in enumerate(dims, start=1):
        key, kw, kb = jax.random.split(key, 3)
        bound = 1.0 / (din ** 0.5)
        params[f"w{i}"] = jax.random.uniform(
            kw, (din, dout), jnp.float32, minval=-bound, maxval=bound)
        params[f"b{i}"] = jax.random.uniform(
            kb, (1, dout), jnp.float32, minval=-bound, maxval=bound)
    return params


def decoder_reference(x, params):
    """Pure-JAX reference for correctness checking."""
    h = jnp.maximum(x @ params["w1"] + params["b1"], 0.0)
    h = jnp.maximum(h @ params["w2"] + params["b2"], 0.0)
    h = jnp.maximum(h @ params["w3"] + params["b3"], 0.0)
    return h @ params["w4"] + params["b4"]


if __name__ == "__main__":
    # Small shapes consistent with the module: latent 8, hidden 32, signal 32.
    batch, latent_dim, enc_dim, inp_dim = 8, 8, 32, 32

    key = jax.random.PRNGKey(0)
    key, kx = jax.random.split(key)
    x = jax.random.normal(kx, (batch, latent_dim), dtype=jnp.float32)
    params = init_decoder_params(key, latent_dim, enc_dim, inp_dim)

    fwd = jax.jit(decoder_forward)
    out = fwd(x, params)
    out = jax.block_until_ready(out)

    ref = decoder_reference(x, params)
    assert out.shape == (batch, inp_dim)
    assert jnp.allclose(out, ref, atol=1e-5, rtol=1e-5), "mismatch vs reference"

    print("KERNEL_OK")
</pallas_src>

<mosaic_0001>
module attributes {stable_mosaic.version = 11 : i64} {
  func.func @decoder_kernel(%arg0: i32, %arg1: memref<8x8xf32, #tpu.memory_space<vmem>>, %arg2: memref<8x32xf32, #tpu.memory_space<vmem>>, %arg3: memref<1x32xf32, #tpu.memory_space<vmem>>, %arg4: memref<32x32xf32, #tpu.memory_space<vmem>>, %arg5: memref<1x32xf32, #tpu.memory_space<vmem>>, %arg6: memref<32x32xf32, #tpu.memory_space<vmem>>, %arg7: memref<1x32xf32, #tpu.memory_space<vmem>>, %arg8: memref<32x32xf32, #tpu.memory_space<vmem>>, %arg9: memref<1x32xf32, #tpu.memory_space<vmem>>, %arg10: memref<8x32xf32, #tpu.memory_space<vmem>>) attributes {dimension_semantics = [#tpu.dimension_semantics<parallel>], iteration_bounds = array<i64: 1>, scalar_prefetch = 0 : i64, scratch_operands = 0 : i64, tpu.core_type = #tpu.core_type<tc>, window_params = [{transform_indices = @transform_0, window_bounds = array<i64: 8, 8>}, {pipeline_mode = #tpu.pipeline_mode<synchronous>, transform_indices = @transform_1, window_bounds = array<i64: 8, 32>}, {pipeline_mode = #tpu.pipeline_mode<synchronous>, transform_indices = @transform_2, window_bounds = array<i64: 1, 32>}, {pipeline_mode = #tpu.pipeline_mode<synchronous>, transform_indices = @transform_3, window_bounds = array<i64: 32, 32>}, {pipeline_mode = #tpu.pipeline_mode<synchronous>, transform_indices = @transform_4, window_bounds = array<i64: 1, 32>}, {pipeline_mode = #tpu.pipeline_mode<synchronous>, transform_indices = @transform_5, window_bounds = array<i64: 32, 32>}, {pipeline_mode = #tpu.pipeline_mode<synchronous>, transform_indices = @transform_6, window_bounds = array<i64: 1, 32>}, {pipeline_mode = #tpu.pipeline_mode<synchronous>, transform_indices = @transform_7, window_bounds = array<i64: 32, 32>}, {pipeline_mode = #tpu.pipeline_mode<synchronous>, transform_indices = @transform_8, window_bounds = array<i64: 1, 32>}, {transform_indices = @transform_9, window_bounds = array<i64: 8, 32>}]} {
    %c0 = arith.constant 0 : index
    %c0_0 = arith.constant 0 : index
    %0 = vector.load %arg1[%c0, %c0_0] : memref<8x8xf32, #tpu.memory_space<vmem>>, vector<8x8xf32>
    %c0_1 = arith.constant 0 : index
    %c0_2 = arith.constant 0 : index
    %1 = vector.load %arg2[%c0_1, %c0_2] : memref<8x32xf32, #tpu.memory_space<vmem>>, vector<8x32xf32>
    %cst = arith.constant dense<0.000000e+00> : vector<8x32xf32>
    %2 = tpu.matmul %0, %1, %cst {dimension_numbers = #tpu.dot_dimension_numbers<[1], [0], [0], [1], [0, 0, 1, 1], [], []>} : vector<8x8xf32>, vector<8x32xf32>, vector<8x32xf32> -> vector<8x32xf32>
    %c0_3 = arith.constant 0 : index
    %c0_4 = arith.constant 0 : index
    %3 = vector.load %arg3[%c0_3, %c0_4] : memref<1x32xf32, #tpu.memory_space<vmem>>, vector<1x32xf32>
    %4 = vector.broadcast %3 : vector<1x32xf32> to vector<8x32xf32>
    %5 = arith.addf %2, %4 : vector<8x32xf32>
    %cst_5 = arith.constant 0.000000e+00 : f32
    %6 = vector.broadcast %cst_5 : f32 to vector<8x32xf32>
    %7 = arith.maximumf %5, %6 : vector<8x32xf32>
    %c0_6 = arith.constant 0 : index
    %c0_7 = arith.constant 0 : index
    %8 = vector.load %arg4[%c0_6, %c0_7] : memref<32x32xf32, #tpu.memory_space<vmem>>, vector<32x32xf32>
    %cst_8 = arith.constant dense<0.000000e+00> : vector<8x32xf32>
    %9 = tpu.matmul %7, %8, %cst_8 {dimension_numbers = #tpu.dot_dimension_numbers<[1], [0], [0], [1], [0, 0, 1, 1], [], []>} : vector<8x32xf32>, vector<32x32xf32>, vector<8x32xf32> -> vector<8x32xf32>
    %c0_9 = arith.constant 0 : index
    %c0_10 = arith.constant 0 : index
    %10 = vector.load %arg5[%c0_9, %c0_10] : memref<1x32xf32, #tpu.memory_space<vmem>>, vector<1x32xf32>
    %11 = vector.broadcast %10 : vector<1x32xf32> to vector<8x32xf32>
    %12 = arith.addf %9, %11 : vector<8x32xf32>
    %cst_11 = arith.constant 0.000000e+00 : f32
    %13 = vector.broadcast %cst_11 : f32 to vector<8x32xf32>
    %14 = arith.maximumf %12, %13 : vector<8x32xf32>
    %c0_12 = arith.constant 0 : index
    %c0_13 = arith.constant 0 : index
    %15 = vector.load %arg6[%c0_12, %c0_13] : memref<32x32xf32, #tpu.memory_space<vmem>>, vector<32x32xf32>
    %cst_14 = arith.constant dense<0.000000e+00> : vector<8x32xf32>
    %16 = tpu.matmul %14, %15, %cst_14 {dimension_numbers = #tpu.dot_dimension_numbers<[1], [0], [0], [1], [0, 0, 1, 1], [], []>} : vector<8x32xf32>, vector<32x32xf32>, vector<8x32xf32> -> vector<8x32xf32>
    %c0_15 = arith.constant 0 : index
    %c0_16 = arith.constant 0 : index
    %17 = vector.load %arg7[%c0_15, %c0_16] : memref<1x32xf32, #tpu.memory_space<vmem>>, vector<1x32xf32>
    %18 = vector.broadcast %17 : vector<1x32xf32> to vector<8x32xf32>
    %19 = arith.addf %16, %18 : vector<8x32xf32>
    %cst_17 = arith.constant 0.000000e+00 : f32
    %20 = vector.broadcast %cst_17 : f32 to vector<8x32xf32>
    %21 = arith.maximumf %19, %20 : vector<8x32xf32>
    %c0_18 = arith.constant 0 : index
    %c0_19 = arith.constant 0 : index
    %22 = vector.load %arg8[%c0_18, %c0_19] : memref<32x32xf32, #tpu.memory_space<vmem>>, vector<32x32xf32>
    %cst_20 = arith.constant dense<0.000000e+00> : vector<8x32xf32>
    %23 = tpu.matmul %21, %22, %cst_20 {dimension_numbers = #tpu.dot_dimension_numbers<[1], [0], [0], [1], [0, 0, 1, 1], [], []>} : vector<8x32xf32>, vector<32x32xf32>, vector<8x32xf32> -> vector<8x32xf32>
    %c0_21 = arith.constant 0 : index
    %c0_22 = arith.constant 0 : index
    %24 = vector.load %arg9[%c0_21, %c0_22] : memref<1x32xf32, #tpu.memory_space<vmem>>, vector<1x32xf32>
    %25 = vector.broadcast %24 : vector<1x32xf32> to vector<8x32xf32>
    %26 = arith.addf %23, %25 : vector<8x32xf32>
    %c0_23 = arith.constant 0 : index
    %c0_24 = arith.constant 0 : index
    %27 = vector.load %arg10[%c0_23, %c0_24] : memref<8x32xf32, #tpu.memory_space<vmem>>, vector<8x32xf32>
    tpu.vector_store %arg10[%c0_23, %c0_24], %26 {strides = array<i32>} : memref<8x32xf32, #tpu.memory_space<vmem>>, vector<8x32xf32>,
    return
  }
  func.func @transform_0(%arg0: i32) -> (i32, i32) {
    %c0_i32 = arith.constant 0 : i32
    %c0_i32_0 = arith.constant 0 : i32
    return %arg0, %c0_i32 : i32, i32
  }
  func.func @transform_1(%arg0: i32) -> (i32, i32) {
    %c0_i32 = arith.constant 0 : i32
    %c0_i32_0 = arith.constant 0 : i32
    %c0_i32_1 = arith.constant 0 : i32
    return %c0_i32, %c0_i32_0 : i32, i32
  }
  func.func @transform_2(%arg0: i32) -> (i32, i32) {
    %c0_i32 = arith.constant 0 : i32
    %c0_i32_0 = arith.constant 0 : i32
    %c0_i32_1 = arith.constant 0 : i32
    return %c0_i32, %c0_i32_0 : i32, i32
  }
  func.func @transform_3(%arg0: i32) -> (i32, i32) {
    %c0_i32 = arith.constant 0 : i32
    %c0_i32_0 = arith.constant 0 : i32
    %c0_i32_1 = arith.constant 0 : i32
    return %c0_i32, %c0_i32_0 : i32, i32
  }
  func.func @transform_4(%arg0: i32) -> (i32, i32) {
    %c0_i32 = arith.constant 0 : i32
    %c0_i32_0 = arith.constant 0 : i32
    %c0_i32_1 = arith.constant 0 : i32
    return %c0_i32, %c0_i32_0 : i32, i32
  }
  func.func @transform_5(%arg0: i32) -> (i32, i32) {
    %c0_i32 = arith.constant 0 : i32
    %c0_i32_0 = arith.constant 0 : i32
    %c0_i32_1 = arith.constant 0 : i32
    return %c0_i32, %c0_i32_0 : i32, i32
  }
  func.func @transform_6(%arg0: i32) -> (i32, i32) {
    %c0_i32 = arith.constant 0 : i32
    %c0_i32_0 = arith.constant 0 : i32
    %c0_i32_1 = arith.constant 0 : i32
    return %c0_i32, %c0_i32_0 : i32, i32
  }
  func.func @transform_7(%arg0: i32) -> (i32, i32) {
    %c0_i32 = arith.constant 0 : i32
    %c0_i32_0 = arith.constant 0 : i32
    %c0_i32_1 = arith.constant 0 : i32
    return %c0_i32, %c0_i32_0 : i32, i32
  }
  func.func @transform_8(%arg0: i32) -> (i32, i32) {
    %c0_i32 = arith.constant 0 : i32
    %c0_i32_0 = arith.constant 0 : i32
    %c0_i32_1 = arith.constant 0 : i32
    return %c0_i32, %c0_i32_0 : i32, i32
  }
  func.func @transform_9(%arg0: i32) -> (i32, i32) {
    %c0_i32 = arith.constant 0 : i32
    %c0_i32_0 = arith.constant 0 : i32
    return %arg0, %c0_i32 : i32, i32
  }
}

</mosaic_0001>

<llo_original>
// kernel: decoder_forward.1
$region0: #{decoder_forward.1}
  #allocation0 [shape = 'u32[]', space=smem, size = 0x4, offset = 0x4, fixed_abs, tag = 'smem constant byte address 0x4 - core index']
  #allocation1 [shape = 'u32[144,128]{1,0:T(1,128)}', space=vmem, size = 0x12000, scoped, tag = 'internal scratch']
  %s0 = inlined_call_operand.hbm [shape: f32[8,8], index: 0, kind: input, shape index: {}]
  %s1 = inlined_call_operand.vmem [shape: f32[8,32], index: 1, kind: input, shape index: {}]
  %s2 = inlined_call_operand.vmem [shape: f32[1,32], index: 2, kind: input, shape index: {}]
  %s3 = inlined_call_operand.hbm [shape: f32[32,32], index: 3, kind: input, shape index: {}]
  %s4 = inlined_call_operand.vmem [shape: f32[1,32], index: 4, kind: input, shape index: {}]
  %s5 = inlined_call_operand.hbm [shape: f32[32,32], index: 5, kind: input, shape index: {}]
  %s6 = inlined_call_operand.vmem [shape: f32[1,32], index: 6, kind: input, shape index: {}]
  %s7 = inlined_call_operand.hbm [shape: f32[32,32], index: 7, kind: input, shape index: {}]
  %s8 = inlined_call_operand.vmem [shape: f32[1,32], index: 8, kind: input, shape index: {}]
  %s9 = inlined_call_operand.hbm [shape: f32[8,32], index: 9, kind: output, shape index: {}]
  %s10 = sld [smem:[#allocation0]]
  $region62: #{decoder_forward.1} parent=0
    _
  %s12 = ssub.s32 1, %s10
  %s13 = scalar_select 0, %s12, %s10
  $region1: #{decoder_forward.1} parent=0
    #allocation2 [shape = 'u8[4096]{0}', space=vmem, size = 0x1000, scoped, tag = 'input window, operand 0, single buffered']
    #allocation3 [shape = 's32[1]{0}', space=sflag, size = 0x4, scoped, tag = 'scoped memory for decoder_forward.1']
    #allocation4 [shape = 's32[1]{0}', space=sflag, size = 0x4, scoped, tag = 'scoped memory for decoder_forward.1']
    #allocation5 [shape = 'u8[16384]{0}', space=vmem, size = 0x4000, scoped, tag = 'input window, operand 3, single buffered']
    #allocation6 [shape = 's32[1]{0}', space=sflag, size = 0x4, scoped, tag = 'scoped memory for decoder_forward.1']
    #allocation7 [shape = 'u8[16384]{0}', space=vmem, size = 0x4000, scoped, tag = 'input window, operand 5, single buffered']
    #allocation8 [shape = 'u8[16384]{0}', space=vmem, size = 0x4000, scoped, tag = 'input window, operand 7, single buffered']
    #allocation9 [shape = 's32[1]{0}', space=sflag, size = 0x4, scoped, tag = 'scoped memory for decoder_forward.1']
    #allocation10 [shape = 'u8[4096]{0}', space=vmem, size = 0x1000, scoped, tag = 'output window, operand 0, single buffered']
    %14 = vsyncpa [#allocation3], 0
    %15 = vsyncpa [#allocation6], 0
    %16 = vsyncpa [#allocation9], 0
    %17 = vsyncpa [#allocation4], 0
    // Predicated region
    $region2: #{decoder_forward.1} parent=1 // pred_check
      _
    $region3: #{decoder_forward.1} parent=1 // pred_check_branch
      %19 = sbr.rel (0) target = $region5
    $region4: #{decoder_forward.1} parent=1 // pred_region
      %s21 = ssub.s32 128, 128
      %22 = vsyncadd [#allocation3], %s21
      %s24 = sshll.u32 [#allocation2], 4
      %s25 = int_to_ptr.vmem [resolvable:$true] %s24
      %27 = dma.hbm_to_vmem [thread:$0]  %s0, 128, %s25, [#allocation3]
    $region5: #{decoder_forward.1} parent=1 // pred_fallthru
      _
    // Predicated region
    $region6: #{decoder_forward.1} parent=1 // pred_check
      _
    $region7: #{decoder_forward.1} parent=1 // pred_check_branch
      %29 = sbr.rel (0) target = $region9
    $region8: #{decoder_forward.1} parent=1 // pred_region
      _
    $region9: #{decoder_forward.1} parent=1 // pred_fallthru
      _
    // Predicated region
    $region10: #{decoder_forward.1} parent=1 // pred_check
      _
    $region11: #{decoder_forward.1} parent=1 // pred_check_branch
      %31 = sbr.rel (0) target = $region13
    $region12: #{decoder_forward.1} parent=1 // pred_region
      _
    $region13: #{decoder_forward.1} parent=1 // pred_fallthru
      _
    // Predicated region
    $region14: #{decoder_forward.1} parent=1 // pred_check
      _
    $region15: #{decoder_forward.1} parent=1 // pred_check_branch
      %33 = sbr.rel (0) target = $region17
    $region16: #{decoder_forward.1} parent=1 // pred_region
      %s35 = ssub.s32 512, 512
      %36 = vsyncadd [#allocation6], %s35
      %s37 = sshll.u32 [#allocation5], 4
      %s38 = int_to_ptr.vmem [resolvable:$true] %s37
      %43 = dma.hbm_to_vmem [thread:$0]  %s3, 512, %s38, [#allocation6], 128, 128, 8
    $region17: #{decoder_forward.1} parent=1 // pred_fallthru
      _
    // Predicated region
    $region18: #{decoder_forward.1} parent=1 // pred_check
      _
    $region19: #{decoder_forward.1} parent=1 // pred_check_branch
      %45 = sbr.rel (0) target = $region21
    $region20: #{decoder_forward.1} parent=1 // pred_region
      _
    $region21: #{decoder_forward.1} parent=1 // pred_fallthru
      _
    // Predicated region
    $region22: #{decoder_forward.1} parent=1 // pred_check
      _
    $region23: #{decoder_forward.1} parent=1 // pred_check_branch
      %47 = sbr.rel (0) target = $region25
    $region24: #{decoder_forward.1} parent=1 // pred_region
      %s49 = ssub.s32 512, 512
      %50 = vsyncadd [#allocation6], %s49
      %s51 = sshll.u32 [#allocation7], 4
      %s52 = int_to_ptr.vmem [resolvable:$true] %s51
      %57 = dma.hbm_to_vmem [thread:$0]  %s5, 512, %s52, [#allocation6], 128, 128, 8
    $region25: #{decoder_forward.1} parent=1 // pred_fallthru
      _
    // Predicated region
    $region26: #{decoder_forward.1} parent=1 // pred_check
      _
    $region27: #{decoder_forward.1} parent=1 // pred_check_branch
      %59 = sbr.rel (0) target = $region29
    $region28: #{decoder_forward.1} parent=1 // pred_region
      _
    $region29: #{decoder_forward.1} parent=1 // pred_fallthru
      _
    // Predicated region
    $region30: #{decoder_forward.1} parent=1 // pred_check
      _
    $region31: #{decoder_forward.1} parent=1 // pred_check_branch
      %61 = sbr.rel (0) target = $region33
    $region32: #{decoder_forward.1} parent=1 // pred_region
      %s63 = ssub.s32 512, 512
      %64 = vsyncadd [#allocation9], %s63
      %s65 = sshll.u32 [#allocation8], 4
      %s66 = int_to_ptr.vmem [resolvable:$true] %s65
      %71 = dma.hbm_to_vmem [thread:$0]  %s7, 512, %s66, [#allocation9], 128, 128, 8
    $region33: #{decoder_forward.1} parent=1 // pred_fallthru
      _
    // Predicated region
    $region34: #{decoder_forward.1} parent=1 // pred_check
      _
    $region35: #{decoder_forward.1} parent=1 // pred_check_branch
      %73 = sbr.rel (0) target = $region37
    $region36: #{decoder_forward.1} parent=1 // pred_region
      _
    $region37: #{decoder_forward.1} parent=1 // pred_fallthru
      _
    // Predicated region
    $region38: #{decoder_forward.1} parent=1 // pred_check
      _
    $region39: #{decoder_forward.1} parent=1 // pred_check_branch
      %75 = sbr.rel (0) target = $region41
    $region40: #{decoder_forward.1} parent=1 // pred_region
      %76 = dma.done [#allocation3], 128
    $region41: #{decoder_forward.1} parent=1 // pred_fallthru
      _
    // Predicated region
    $region42: #{decoder_forward.1} parent=1 // pred_check
      _
    $region43: #{decoder_forward.1} parent=1 // pred_check_branch
      %78 = sbr.rel (0) target = $region45
    $region44: #{decoder_forward.1} parent=1 // pred_region
      %79 = dma.done [#allocation6], 512
    $region45: #{decoder_forward.1} parent=1 // pred_fallthru
      _
    // Predicated region
    $region46: #{decoder_forward.1} parent=1 // pred_check
      _
    $region47: #{decoder_forward.1} parent=1 // pred_check_branch
      %81 = sbr.rel (0) target = $region49
    $region48: #{decoder_forward.1} parent=1 // pred_region
      %82 = dma.done [#allocation6], 512
    $region49: #{decoder_forward.1} parent=1 // pred_fallthru
      _
    // Predicated region
    $region50: #{decoder_forward.1} parent=1 // pred_check
      _
    $region51: #{decoder_forward.1} parent=1 // pred_check_branch
      %84 = sbr.rel (0) target = $region53
    $region52: #{decoder_forward.1} parent=1 // pred_region
      %85 = dma.done [#allocation9], 512
    $region53: #{decoder_forward.1} parent=1 // pred_fallthru
      _
    %v86 = vld [vmem:[#allocation2] sm:$0xff]
    %v87 = vld [vmem:[%s1] sm:$0xff]
    %v88 = vld [vmem:[%s2] sm:$0x1]
    %v90 = vlaneseq
    %v91 = vshrl.u32 %v90, 7
    %v92 = vsub.s32 0, %v91
    %v93 = vrot.slane %v88, %v92
    %vm95 = vcmask 64512
    %v97 = vsel %vm95, %v86, 0
    %99 = vmatprep.subr.mxu0 0.0
    %100 = vmatpush1.msra.mxu0 %v87
    %101 = vmatprep.subr.mxu0 0.0
    %102 = vmatpush1.msra.mxu0 0.0
    %103 = vmatprep.subr.mxu0 0.0
    %104 = vmatpush1.msra.mxu0 0.0
    %105 = vmatprep.subr.mxu0 0.0
    %106 = vmatpush1.msra.mxu0 0.0
    %107 = vmatprep.subr.mxu0 0.0
    %108 = vmatpush1.msra.mxu0 0.0
    %109 = vmatprep.subr.mxu0 0.0
    %110 = vmatpush1.msra.mxu0 0.0
    %111 = vmatprep.subr.mxu0 0.0
    %112 = vmatpush1.msra.mxu0 0.0
    %113 = vmatprep.subr.mxu0 0.0
    %114 = vmatpush1.msra.mxu0 0.0
    %115 = vmatprep.subr.mxu0 0.0
    %116 = vmatpush1.msra.mxu0 0.0
    %117 = vmatprep.subr.mxu0 0.0
    %118 = vmatpush1.msra.mxu0 0.0
    %119 = vmatprep.subr.mxu0 0.0
    %120 = vmatpush1.msra.mxu0 0.0
    %121 = vmatprep.subr.mxu0 0.0
    %122 = vmatpush1.msra.mxu0 0.0
    %123 = vmatprep.subr.mxu0 0.0
    %124 = vmatpush1.msra.mxu0 0.0
    %125 = vmatprep.subr.mxu0 0.0
    %126 = vmatpush1.msra.mxu0 0.0
    %127 = vmatprep.subr.mxu0 0.0
    %128 = vmatpush1.msra.mxu0 0.0
    %129 = vmatprep.subr.mxu0 0.0
    %130 = vmatpush1.msra.mxu0 0.0
    %131 = vmatprep.subr.mxu0 0.0
    %132 = vmatpush1.msra.mxu0 0.0
    %133 = vmatprep.subr.mxu0 0.0
    %134 = vmatpush1.msra.mxu0 0.0
    %135 = vmatprep.subr.mxu0 0.0
    %136 = vmatpush1.msra.mxu0 0.0
    %137 = vmatprep.subr.mxu0 0.0
    %138 = vmatpush1.msra.mxu0 0.0
    %139 = vmatprep.subr.mxu0 0.0
    %140 = vmatpush1.msra.mxu0 0.0
    %141 = vmatprep.subr.mxu0 0.0
    %142 = vmatpush1.msra.mxu0 0.0
    %143 = vmatprep.subr.mxu0 0.0
    %144 = vmatpush1.msra.mxu0 0.0
    %145 = vmatprep.subr.mxu0 0.0
    %146 = vmatpush1.msra.mxu0 0.0
    %147 = vmatprep.subr.mxu0 0.0
    %148 = vmatpush1.msra.mxu0 0.0
    %149 = vmatprep.subr.mxu0 0.0
    %150 = vmatpush1.msra.mxu0 0.0
    %151 = vmatprep.subr.mxu0 0.0
    %152 = vmatpush1.msra.mxu0 0.0
    %153 = vmatprep.subr.mxu0 0.0
    %154 = vmatpush1.msra.mxu0 0.0
    %155 = vmatprep.subr.mxu0 0.0
    %156 = vmatpush1.msra.mxu0 0.0
    %157 = vmatprep.subr.mxu0 0.0
    %158 = vmatpush1.msra.mxu0 0.0
    %159 = vmatprep.subr.mxu0 0.0
    %160 = vmatpush1.msra.mxu0 0.0
    %161 = vmatprep.subr.mxu0 0.0
    %162 = vmatpush1.msra.mxu0 0.0
    %163 = vmatprep.mubr.f32.mxu0 0.0
    %164 = vmatmul.mubr.f32.gmra.mrb[0].mxu0 %v97
    %v165 = vpop.f32.mrb[0].mxu0
    %v166 = vadd.f32 %v93, %v165
    %v167 = vpop.f32.mrb[0].mxu0
    %168 = vdwg.mxu0
    %v169 = vmax.f32 %v166, 0.0
    %v170 = vld [vmem:[#allocation5] sm:$0xff]
    %v171 = vld [vmem:[#allocation5 + $0x8] sm:$0xff]
    %v172 = vld [vmem:[#allocation5 + $0x10] sm:$0xff]
    %v173 = vld [vmem:[#allocation5 + $0x18] sm:$0xff]
    %v174 = vld [vmem:[%s4] sm:$0x1]
    %v176 = vlaneseq
    %v177 = vshrl.u32 %v176, 7
    %v178 = vsub.s32 0, %v177
    %v179 = vrot.slane %v174, %v178
    %vm181 = vcmask 261120
    %v183 = vsel %vm181, %v169, 0
    %185 = vmatprep.subr.mxu0 0.0
    %186 = vmatpush1.msra.mxu0 %v170
    %187 = vmatprep.subr.mxu0 0.0
    %188 = vmatpush1.msra.mxu0 %v171
    %189 = vmatprep.subr.mxu0 0.0
    %190 = vmatpush1.msra.mxu0 %v172
    %191 = vmatprep.subr.mxu0 0.0
    %192 = vmatpush1.msra.mxu0 %v173
    %193 = vmatprep.subr.mxu0 0.0
    %194 = vmatpush1.msra.mxu0 0.0
    %195 = vmatprep.subr.mxu0 0.0
    %196 = vmatpush1.msra.mxu0 0.0
    %197 = vmatprep.subr.mxu0 0.0
    %198 = vmatpush1.msra.mxu0 0.0
    %199 = vmatprep.subr.mxu0 0.0
    %200 = vmatpush1.msra.mxu0 0.0
    %201 = vmatprep.subr.mxu0 0.0
    %202 = vmatpush1.msra.mxu0 0.0
    %203 = vmatprep.subr.mxu0 0.0
    %204 = vmatpush1.msra.mxu0 0.0
    %205 = vmatprep.subr.mxu0 0.0
    %206 = vmatpush1.msra.mxu0 0.0
    %207 = vmatprep.subr.mxu0 0.0
    %208 = vmatpush1.msra.mxu0 0.0
    %209 = vmatprep.subr.mxu0 0.0
    %210 = vmatpush1.msra.mxu0 0.0
    %211 = vmatprep.subr.mxu0 0.0
    %212 = vmatpush1.msra.mxu0 0.0
    %213 = vmatprep.subr.mxu0 0.0
    %214 = vmatpush1.msra.mxu0 0.0
    %215 = vmatprep.subr.mxu0 0.0
    %216 = vmatpush1.msra.mxu0 0.0
    %217 = vmatprep.subr.mxu0 0.0
    %218 = vmatpush1.msra.mxu0 0.0
    %219 = vmatprep.subr.mxu0 0.0
    %220 = vmatpush1.msra.mxu0 0.0
    %221 = vmatprep.subr.mxu0 0.0
    %222 = vmatpush1.msra.mxu0 0.0
    %223 = vmatprep.subr.mxu0 0.0
    %224 = vmatpush1.msra.mxu0 0.0
    %225 = vmatprep.subr.mxu0 0.0
    %226 = vmatpush1.msra.mxu0 0.0
    %227 = vmatprep.subr.mxu0 0.0
    %228 = vmatpush1.msra.mxu0 0.0
    %229 = vmatprep.subr.mxu0 0.0
    %230 = vmatpush1.msra.mxu0 0.0
    %231 = vmatprep.subr.mxu0 0.0
    %232 = vmatpush1.msra.mxu0 0.0
    %233 = vmatprep.subr.mxu0 0.0
    %234 = vmatpush1.msra.mxu0 0.0
    %235 = vmatprep.subr.mxu0 0.0
    %236 = vmatpush1.msra.mxu0 0.0
    %237 = vmatprep.subr.mxu0 0.0
    %238 = vmatpush1.msra.mxu0 0.0
    %239 = vmatprep.subr.mxu0 0.0
    %240 = vmatpush1.msra.mxu0 0.0
    %241 = vmatprep.subr.mxu0 0.0
    %242 = vmatpush1.msra.mxu0 0.0
    %243 = vmatprep.subr.mxu0 0.0
    %244 = vmatpush1.msra.mxu0 0.0
    %245 = vmatprep.subr.mxu0 0.0
    %246 = vmatpush1.msra.mxu0 0.0
    %247 = vmatprep.subr.mxu0 0.0
    %248 = vmatpush1.msra.mxu0 0.0
    %249 = vmatprep.mubr.f32.mxu0 0.0
    %250 = vmatmul.mubr.f32.gmra.mrb[0].mxu0 %v183
    %v251 = vpop.f32.mrb[0].mxu0
    %v252 = vadd.f32 %v179, %v251
    %v253 = vpop.f32.mrb[0].mxu0
    %254 = vdwg.mxu0
    %v255 = vmax.f32 %v252, 0.0
    %v256 = vld [vmem:[#allocation7] sm:$0xff]
    %v257 = vld [vmem:[#allocation7 + $0x8] sm:$0xff]
    %v258 = vld [vmem:[#allocation7 + $0x10] sm:$0xff]
    %v259 = vld [vmem:[#allocation7 + $0x18] sm:$0xff]
    %v260 = vld [vmem:[%s6] sm:$0x1]
    %v262 = vlaneseq
    %v263 = vshrl.u32 %v262, 7
    %v264 = vsub.s32 0, %v263
    %v265 = vrot.slane %v260, %v264
    %v268 = vsel %vm181, %v255, 0
    %270 = vmatprep.subr.mxu0 0.0
    %271 = vmatpush1.msra.mxu0 %v256
    %272 = vmatprep.subr.mxu0 0.0
    %273 = vmatpush1.msra.mxu0 %v257
    %274 = vmatprep.subr.mxu0 0.0
    %275 = vmatpush1.msra.mxu0 %v258
    %276 = vmatprep.subr.mxu0 0.0
    %277 = vmatpush1.msra.mxu0 %v259
    %278 = vmatprep.subr.mxu0 0.0
    %279 = vmatpush1.msra.mxu0 0.0
    %280 = vmatprep.subr.mxu0 0.0
    %281 = vmatpush1.msra.mxu0 0.0
    %282 = vmatprep.subr.mxu0 0.0
    %283 = vmatpush1.msra.mxu0 0.0
    %284 = vmatprep.subr.mxu0 0.0
    %285 = vmatpush1.msra.mxu0 0.0
    %286 = vmatprep.subr.mxu0 0.0
    %287 = vmatpush1.msra.mxu0 0.0
    %288 = vmatprep.subr.mxu0 0.0
    %289 = vmatpush1.msra.mxu0 0.0
    %290 = vmatprep.subr.mxu0 0.0
    %291 = vmatpush1.msra.mxu0 0.0
    %292 = vmatprep.subr.mxu0 0.0
    %293 = vmatpush1.msra.mxu0 0.0
    %294 = vmatprep.subr.mxu0 0.0
    %295 = vmatpush1.msra.mxu0 0.0
    %296 = vmatprep.subr.mxu0 0.0
    %297 = vmatpush1.msra.mxu0 0.0
    %298 = vmatprep.subr.mxu0 0.0
    %299 = vmatpush1.msra.mxu0 0.0
    %300 = vmatprep.subr.mxu0 0.0
    %301 = vmatpush1.msra.mxu0 0.0
    %302 = vmatprep.subr.mxu0 0.0
    %303 = vmatpush1.msra.mxu0 0.0
    %304 = vmatprep.subr.mxu0 0.0
    %305 = vmatpush1.msra.mxu0 0.0
    %306 = vmatprep.subr.mxu0 0.0
    %307 = vmatpush1.msra.mxu0 0.0
    %308 = vmatprep.subr.mxu0 0.0
    %309 = vmatpush1.msra.mxu0 0.0
    %310 = vmatprep.subr.mxu0 0.0
    %311 = vmatpush1.msra.mxu0 0.0
    %312 = vmatprep.subr.mxu0 0.0
    %313 = vmatpush1.msra.mxu0 0.0
    %314 = vmatprep.subr.mxu0 0.0
    %315 = vmatpush1.msra.mxu0 0.0
    %316 = vmatprep.subr.mxu0 0.0
    %317 = vmatpush1.msra.mxu0 0.0
    %318 = vmatprep.subr.mxu0 0.0
    %319 = vmatpush1.msra.mxu0 0.0
    %320 = vmatprep.subr.mxu0 0.0
    %321 = vmatpush1.msra.mxu0 0.0
    %322 = vmatprep.subr.mxu0 0.0
    %323 = vmatpush1.msra.mxu0 0.0
    %324 = vmatprep.subr.mxu0 0.0
    %325 = vmatpush1.msra.mxu0 0.0
    %326 = vmatprep.subr.mxu0 0.0
    %327 = vmatpush1.msra.mxu0 0.0
    %328 = vmatprep.subr.mxu0 0.0
    %329 = vmatpush1.msra.mxu0 0.0
    %330 = vmatprep.subr.mxu0 0.0
    %331 = vmatpush1.msra.mxu0 0.0
    %332 = vmatprep.subr.mxu0 0.0
    %333 = vmatpush1.msra.mxu0 0.0
    %334 = vmatprep.mubr.f32.mxu0 0.0
    %335 = vmatmul.mubr.f32.gmra.mrb[0].mxu0 %v268
    %v336 = vpop.f32.mrb[0].mxu0
    %v337 = vadd.f32 %v265, %v336
    %v338 = vpop.f32.mrb[0].mxu0
    %339 = vdwg.mxu0
    %v340 = vmax.f32 %v337, 0.0
    %v341 = vld [vmem:[#allocation8] sm:$0xff]
    %v342 = vld [vmem:[#allocation8 + $0x8] sm:$0xff]
    %v343 = vld [vmem:[#allocation8 + $0x10] sm:$0xff]
    %v344 = vld [vmem:[#allocation8 + $0x18] sm:$0xff]
    %v345 = vld [vmem:[%s8] sm:$0x1]
    %v347 = vlaneseq
    %v348 = vshrl.u32 %v347, 7
    %v349 = vsub.s32 0, %v348
    %v350 = vrot.slane %v345, %v349
    %v353 = vsel %vm181, %v340, 0
    %355 = vmatprep.subr.mxu0 0.0
    %356 = vmatpush1.msra.mxu0 %v341
    %357 = vmatprep.subr.mxu0 0.0
    %358 = vmatpush1.msra.mxu0 %v342
    %359 = vmatprep.subr.mxu0 0.0
    %360 = vmatpush1.msra.mxu0 %v343
    %361 = vmatprep.subr.mxu0 0.0
    %362 = vmatpush1.msra.mxu0 %v344
    %363 = vmatprep.subr.mxu0 0.0
    %364 = vmatpush1.msra.mxu0 0.0
    %365 = vmatprep.subr.mxu0 0.0
    %366 = vmatpush1.msra.mxu0 0.0
    %367 = vmatprep.subr.mxu0 0.0
    %368 = vmatpush1.msra.mxu0 0.0
    %369 = vmatprep.subr.mxu0 0.0
    %370 = vmatpush1.msra.mxu0 0.0
    %371 = vmatprep.subr.mxu0 0.0
    %372 = vmatpush1.msra.mxu0 0.0
    %373 = vmatprep.subr.mxu0 0.0
    %374 = vmatpush1.msra.mxu0 0.0
    %375 = vmatprep.subr.mxu0 0.0
    %376 = vmatpush1.msra.mxu0 0.0
    %377 = vmatprep.subr.mxu0 0.0
    %378 = vmatpush1.msra.mxu0 0.0
    %379 = vmatprep.subr.mxu0 0.0
    %380 = vmatpush1.msra.mxu0 0.0
    %381 = vmatprep.subr.mxu0 0.0
    %382 = vmatpush1.msra.mxu0 0.0
    %383 = vmatprep.subr.mxu0 0.0
    %384 = vmatpush1.msra.mxu0 0.0
    %385 = vmatprep.subr.mxu0 0.0
    %386 = vmatpush1.msra.mxu0 0.0
    %387 = vmatprep.subr.mxu0 0.0
    %388 = vmatpush1.msra.mxu0 0.0
    %389 = vmatprep.subr.mxu0 0.0
    %390 = vmatpush1.msra.mxu0 0.0
    %391 = vmatprep.subr.mxu0 0.0
    %392 = vmatpush1.msra.mxu0 0.0
    %393 = vmatprep.subr.mxu0 0.0
    %394 = vmatpush1.msra.mxu0 0.0
    %395 = vmatprep.subr.mxu0 0.0
    %396 = vmatpush1.msra.mxu0 0.0
    %397 = vmatprep.subr.mxu0 0.0
    %398 = vmatpush1.msra.mxu0 0.0
    %399 = vmatprep.subr.mxu0 0.0
    %400 = vmatpush1.msra.mxu0 0.0
    %401 = vmatprep.subr.mxu0 0.0
    %402 = vmatpush1.msra.mxu0 0.0
    %403 = vmatprep.subr.mxu0 0.0
    %404 = vmatpush1.msra.mxu0 0.0
    %405 = vmatprep.subr.mxu0 0.0
    %406 = vmatpush1.msra.mxu0 0.0
    %407 = vmatprep.subr.mxu0 0.0
    %408 = vmatpush1.msra.mxu0 0.0
    %409 = vmatprep.subr.mxu0 0.0
    %410 = vmatpush1.msra.mxu0 0.0
    %411 = vmatprep.subr.mxu0 0.0
    %412 = vmatpush1.msra.mxu0 0.0
    %413 = vmatprep.subr.mxu0 0.0
    %414 = vmatpush1.msra.mxu0 0.0
    %415 = vmatprep.subr.mxu0 0.0
    %416 = vmatpush1.msra.mxu0 0.0
    %417 = vmatprep.subr.mxu0 0.0
    %418 = vmatpush1.msra.mxu0 0.0
    %419 = vmatprep.mubr.f32.mxu0 0.0
    %420 = vmatmul.mubr.f32.gmra.mrb[0].mxu0 %v353
    %v421 = vpop.f32.mrb[0].mxu0
    %v422 = vadd.f32 %v350, %v421
    %v423 = vpop.f32.mrb[0].mxu0
    %424 = vdwg.mxu0
    %425 = vst.msk [vmem:[#allocation10] sm:$0xff] %vm181, %v422
    // Predicated region
    $region54: #{decoder_forward.1} parent=1 // pred_check
      _
    $region55: #{decoder_forward.1} parent=1 // pred_check_branch
      %427 = sbr.rel (0) target = $region57
    $region56: #{decoder_forward.1} parent=1 // pred_region
      %s429 = ssub.s32 128, 128
      %430 = vsyncadd [#allocation4], %s429
      %s432 = sshll.u32 [#allocation10], 4
      %s433 = int_to_ptr.vmem [resolvable:$true] %s432
      %435 = dma.vmem_to_hbm [thread:$0]  %s433, 128, %s9, [#allocation4]
    $region57: #{decoder_forward.1} parent=1 // pred_fallthru
      _
    // Predicated region
    $region58: #{decoder_forward.1} parent=1 // pred_check
      _
    $region59: #{decoder_forward.1} parent=1 // pred_check_branch
      %437 = sbr.rel (0) target = $region61
    $region60: #{decoder_forward.1} parent=1 // pred_region
      %438 = dma.done [#allocation4], 128
    $region61: #{decoder_forward.1} parent=1 // pred_fallthru
      _
    %439 = vsyncpa [#allocation3], 1
    %440 = vsyncpa [#allocation6], 1
    %441 = vsyncpa [#allocation9], 1
    %442 = vsyncpa [#allocation4], 1

</llo_original>
